<compile_context>
chip_gen: v5e
topology: v5e:2x2
jax: 0.10.0
libtpu: 0.0.40
codegen_flags: <defaults>
</compile_context>

<pallas_src>
import jax
import jax.numpy as jnp
import numpy as np
from jax.experimental import pallas as pl
from jax.experimental.pallas import tpu as pltpu


# ----------------------------- kernel -----------------------------

def cos_layer_kernel(x_ref, wt_ref, b_ref, o_ref):
    # x_ref:  (TM, fin)  bf16   batch tile
    # wt_ref: (fin, TN)  bf16   pre-transposed, omega folded in
    # b_ref:  (1, TN)    f32    omega folded in
    # o_ref:  (TM, TN)          output tile
    z = jnp.dot(x_ref[...], wt_ref[...], preferred_element_type=jnp.float32)
    z = z + b_ref[...]                       # broadcast (1, TN) over rows, f32
    o_ref[...] = jnp.cos(z).astype(o_ref.dtype)


# ----------------------------- helpers -----------------------------

def _round_up(x, m):
    return ((x + m - 1) // m) * m


def _pick_col_tile(fout, max_tn=1024):
    """Largest lane-dense (multiple of 128) divisor of fout <= max_tn, else full fout."""
    if fout <= max_tn:
        return fout
    for tn in range(max_tn, 127, -128):
        if fout % tn == 0:
            return tn
    # TODO(synk): pad fout to a multiple of 128 if no clean divisor exists.
    return fout


def _pick_row_tile(n, fin, tn, in_itemsize, out_itemsize,
                   max_tm=1024, budget_bytes=40 << 20):
    """Biggest row tile (multiple of 16 for bf16 sublane packing) that fits the budget."""
    tm = min(max_tm, _round_up(max(n, 1), 16))
    while tm > 16:
        need = (2 * tm * fin * in_itemsize        # double-buffered x tile
                + 2 * tm * tn * out_itemsize      # double-buffered out tile
                + 2 * fin * tn * in_itemsize      # (worst case) double-buffered weight
                + 2 * tn * 4)                     # bias
        if need <= budget_bytes:
            break
        tm = _round_up(tm // 2, 16)
    return max(tm, 16)


# ----------------------------- wrapper -----------------------------

def prepare_cos_layer_params(weight, bias, omega, compute_dtype=jnp.bfloat16):
    """One-time parameter prep: fold omega, transpose weight, cast to MXU dtype.

    weight: (fout, fin), bias: (fout,)  ->  wt_scaled: (fin, fout) bf16, b_scaled: (1, fout) f32
    """
    omega = jnp.float32(omega)
    wt_scaled = (omega * weight.astype(jnp.float32)).T.astype(compute_dtype)
    b_scaled = (omega * bias.astype(jnp.float32)).reshape(1, -1)
    return wt_scaled, b_scaled


def cos_layer_apply(x, wt_scaled, b_scaled, *, max_tm=1024, max_tn=1024):
    """x: (N, fin) -> (N, fout) = cos(x @ wt_scaled + b_scaled)."""
    N, fin = x.shape
    fin_w, fout = wt_scaled.shape
    assert fin == fin_w, (fin, fin_w)
    out_dtype = x.dtype

    # Feed the MXU bf16 (ideally x is already bf16 upstream; cast here if not).
    if x.dtype != wt_scaled.dtype:
        x = x.astype(wt_scaled.dtype)

    tn = _pick_col_tile(fout, max_tn)
    tm = _pick_row_tile(N, fin, tn,
                        in_itemsize=wt_scaled.dtype.itemsize,
                        out_itemsize=np.dtype(out_dtype).itemsize,
                        max_tm=max_tm)

    n_pad = _round_up(N, tm)
    if n_pad != N:
        x = jnp.pad(x, ((0, n_pad - N), (0, 0)))

    # Explicit VMEM budget (conservative, safe for v7x's 64 MiB physical VMEM).
    need = (2 * tm * fin * wt_scaled.dtype.itemsize
            + 2 * tm * tn * np.dtype(out_dtype).itemsize
            + 2 * fin * tn * wt_scaled.dtype.itemsize
            + 2 * tn * 4)
    vmem_limit = int(min(max(2 * need, 32 << 20), 48 << 20))

    grid = (n_pad // tm, fout // tn)

    out = pl.pallas_call(
        cos_layer_kernel,
        out_shape=jax.ShapeDtypeStruct((n_pad, fout), out_dtype),
        grid_spec=pltpu.PrefetchScalarGridSpec(
            num_scalar_prefetch=0,
            grid=grid,
            in_specs=[
                pl.BlockSpec((tm, fin), lambda i, j: (i, 0)),   # x row tile
                pl.BlockSpec((fin, tn), lambda i, j: (0, j)),   # weight col tile (resident per j)
                pl.BlockSpec((1, tn), lambda i, j: (0, j)),     # bias col tile
            ],
            out_specs=pl.BlockSpec((tm, tn), lambda i, j: (i, j)),
        ),
        compiler_params=pltpu.CompilerParams(
            dimension_semantics=("parallel", "parallel"),
            vmem_limit_bytes=vmem_limit,
        ),
    )(x, wt_scaled, b_scaled)

    return out[:N] if n_pad != N else out


# ----------------------------- init (matches PyTorch module) -----------------------------

def init_cos_layer_params(key, fin, fout, omega, is_first):
    """Deterministic init matching the PyTorch module's __init__ semantics."""
    kw, kb = jax.random.split(key)
    if is_first:
        bound_w = 1.0 / fin
    else:
        bound_w = float(np.sqrt(6.0 / fin)) / omega
    weight = jax.random.uniform(kw, (fout, fin), jnp.float32,
                                minval=-bound_w, maxval=bound_w)
    # nn.Linear default bias init: U(-1/sqrt(fin), 1/sqrt(fin))
    bound_b = 1.0 / float(np.sqrt(fin))
    bias = jax.random.uniform(kb, (fout,), jnp.float32,
                              minval=-bound_b, maxval=bound_b)
    return weight, bias


if __name__ == "__main__":
    key = jax.random.PRNGKey(0)
    k_x, k_p = jax.random.split(key)

    N, fin, fout = 8, 32, 128
    omega = 30.0
    is_first = True

    x = jax.random.normal(k_x, (N, fin), jnp.float32)
    weight, bias = init_cos_layer_params(k_p, fin, fout, omega, is_first)

    # One-time parameter prep (transpose + omega-fold + bf16 cast).
    wt_scaled, b_scaled = prepare_cos_layer_params(weight, bias, omega)

    out = cos_layer_apply(x, wt_scaled, b_scaled)
    out = jax.block_until_ready(out)
    assert out.shape == (N, fout)

    # Tight check vs. a same-precision reference (bf16 inputs, f32 accumulate).
    x_bf = x.astype(jnp.bfloat16)
    ref_bf = jnp.cos(jnp.dot(x_bf, wt_scaled, preferred_element_type=jnp.float32)
                     + b_scaled).astype(out.dtype)
    np.testing.assert_allclose(np.asarray(out), np.asarray(ref_bf), rtol=0, atol=2e-3)

    # Loose check vs. the original f32 module semantics (bf16 weight/input quantization).
    ref = jnp.cos(omega * (x @ weight.T + bias))
    np.testing.assert_allclose(np.asarray(out), np.asarray(ref), rtol=0, atol=1e-1)

    print("KERNEL_OK")
</pallas_src>

<mosaic_0001>
module attributes {stable_mosaic.version = 11 : i64} {
  func.func @cos_layer_kernel(%arg0: i32, %arg1: i32, %arg2: memref<16x32xbf16, #tpu.memory_space<vmem>>, %arg3: memref<32x128xbf16, #tpu.memory_space<vmem>>, %arg4: memref<1x128xf32, #tpu.memory_space<vmem>>, %arg5: memref<16x128xf32, #tpu.memory_space<vmem>>) attributes {dimension_semantics = [#tpu.dimension_semantics<parallel>, #tpu.dimension_semantics<parallel>], iteration_bounds = array<i64: 1, 1>, scalar_prefetch = 0 : i64, scratch_operands = 0 : i64, tpu.core_type = #tpu.core_type<tc>, window_params = [{transform_indices = @transform_0, window_bounds = array<i64: 16, 32>}, {transform_indices = @transform_1, window_bounds = array<i64: 32, 128>}, {transform_indices = @transform_2, window_bounds = array<i64: 1, 128>}, {transform_indices = @transform_3, window_bounds = array<i64: 16, 128>}]} {
    %c0 = arith.constant 0 : index
    %c0_0 = arith.constant 0 : index
    %0 = vector.load %arg2[%c0, %c0_0] : memref<16x32xbf16, #tpu.memory_space<vmem>>, vector<16x32xbf16>
    %c0_1 = arith.constant 0 : index
    %c0_2 = arith.constant 0 : index
    %1 = vector.load %arg3[%c0_1, %c0_2] : memref<32x128xbf16, #tpu.memory_space<vmem>>, vector<32x128xbf16>
    %cst = arith.constant dense<0.000000e+00> : vector<16x128xf32>
    %2 = tpu.matmul %0, %1, %cst {dimension_numbers = #tpu.dot_dimension_numbers<[1], [0], [0], [1], [0, 0, 1, 1], [], []>} : vector<16x32xbf16>, vector<32x128xbf16>, vector<16x128xf32> -> vector<16x128xf32>
    %c0_3 = arith.constant 0 : index
    %c0_4 = arith.constant 0 : index
    %3 = vector.load %arg4[%c0_3, %c0_4] : memref<1x128xf32, #tpu.memory_space<vmem>>, vector<1x128xf32>
    %4 = vector.broadcast %3 : vector<1x128xf32> to vector<16x128xf32>
    %5 = arith.addf %2, %4 : vector<16x128xf32>
    %6 = math.cos %5 : vector<16x128xf32>
    %c0_5 = arith.constant 0 : index
    %c0_6 = arith.constant 0 : index
    %7 = vector.load %arg5[%c0_5, %c0_6] : memref<16x128xf32, #tpu.memory_space<vmem>>, vector<16x128xf32>
    tpu.vector_store %arg5[%c0_5, %c0_6], %6 {strides = array<i32>} : memref<16x128xf32, #tpu.memory_space<vmem>>, vector<16x128xf32>,
    return
  }
  func.func @transform_0(%arg0: i32, %arg1: i32) -> (i32, i32) {
    %c0_i32 = arith.constant 0 : i32
    %c0_i32_0 = arith.constant 0 : i32
    return %arg0, %c0_i32 : i32, i32
  }
  func.func @transform_1(%arg0: i32, %arg1: i32) -> (i32, i32) {
    %c0_i32 = arith.constant 0 : i32
    %c0_i32_0 = arith.constant 0 : i32
    return %c0_i32, %arg1 : i32, i32
  }
  func.func @transform_2(%arg0: i32, %arg1: i32) -> (i32, i32) {
    %c0_i32 = arith.constant 0 : i32
    %c0_i32_0 = arith.constant 0 : i32
    return %c0_i32, %arg1 : i32, i32
  }
  func.func @transform_3(%arg0: i32, %arg1: i32) -> (i32, i32) {
    %c0_i32 = arith.constant 0 : i32
    return %arg0, %arg1 : i32, i32
  }
}

</mosaic_0001>

<llo_original>
// kernel: tpu_custom_call.1
$region0: #{tpu_custom_call.1}
  #allocation0 [shape = 'u32[]', space=smem, size = 0x4, offset = 0x4, fixed_abs, tag = 'smem constant byte address 0x4 - core index']
  #allocation1 [shape = 'u32[72,128]{1,0:T(1,128)}', space=vmem, size = 0x9000, scoped, tag = 'internal scratch']
  %s0 = inlined_call_operand.hbm [shape: bf16[16,32], index: 0, kind: input, shape index: {}]
  %s1 = inlined_call_operand.hbm [shape: bf16[32,128], index: 1, kind: input, shape index: {}]
  %s2 = inlined_call_operand.vmem [shape: f32[1,128], index: 2, kind: input, shape index: {}]
  %s3 = inlined_call_operand.hbm [shape: f32[16,128], index: 3, kind: output, shape index: {}]
  %s4 = sld [smem:[#allocation0]]
  $region30: #{tpu_custom_call.1} parent=0
    _
  %s6 = ssub.s32 1, %s4
  %s7 = scalar_select 0, %s6, %s4
  $region1: #{tpu_custom_call.1} parent=0
    #allocation2 [shape = 'u8[4096]{0}', space=vmem, size = 0x1000, scoped, tag = 'input window, operand 0, single buffered']
    #allocation3 [shape = 's32[1]{0}', space=sflag, size = 0x4, scoped, tag = 'scoped memory for tpu_custom_call.1']
    #allocation4 [shape = 's32[1]{0}', space=sflag, size = 0x4, scoped, tag = 'scoped memory for tpu_custom_call.1']
    #allocation5 [shape = 'u8[8192]{0}', space=vmem, size = 0x2000, scoped, tag = 'input window, operand 1, single buffered']
    #allocation6 [shape = 's32[1]{0}', space=sflag, size = 0x4, scoped, tag = 'scoped memory for tpu_custom_call.1']
    #allocation7 [shape = 'u8[8192]{0}', space=vmem, size = 0x2000, scoped, tag = 'output window, operand 0, single buffered']
    %8 = vsyncpa [#allocation3], 0
    %9 = vsyncpa [#allocation6], 0
    %10 = vsyncpa [#allocation4], 0
    // Predicated region
    $region2: #{tpu_custom_call.1} parent=1 // pred_check
      _
    $region3: #{tpu_custom_call.1} parent=1 // pred_check_branch
      %12 = sbr.rel (0) target = $region5
    $region4: #{tpu_custom_call.1} parent=1 // pred_region
      %14 = vsyncadd [#allocation3], 0
      %s15 = sshll.u32 %s0, 4
      %s16 = int_to_ptr.hbm [resolvable:$true] %s15
      %s17 = sshll.u32 [#allocation2], 4
      %s18 = int_to_ptr.vmem [resolvable:$true] %s17
      %23 = dma.hbm_to_vmem [thread:$0]  %s16, 128, %s18, [#allocation3], 64, 64, 4
    $region5: #{tpu_custom_call.1} parent=1 // pred_fallthru
      _
    // Predicated region
    $region6: #{tpu_custom_call.1} parent=1 // pred_check
      _
    $region7: #{tpu_custom_call.1} parent=1 // pred_check_branch
      %25 = sbr.rel (0) target = $region9
    $region8: #{tpu_custom_call.1} parent=1 // pred_region
      %27 = vsyncadd [#allocation6], 0
      %s28 = sshll.u32 %s1, 4
      %s29 = int_to_ptr.hbm [resolvable:$true] %s28
      %s30 = sshll.u32 [#allocation5], 4
      %s31 = int_to_ptr.vmem [resolvable:$true] %s30
      %36 = dma.hbm_to_vmem [thread:$0]  %s29, 256, %s31, [#allocation6], 64, 64, 4
    $region9: #{tpu_custom_call.1} parent=1 // pred_fallthru
      _
    // Predicated region
    $region10: #{tpu_custom_call.1} parent=1 // pred_check
      _
    $region11: #{tpu_custom_call.1} parent=1 // pred_check_branch
      %38 = sbr.rel (0) target = $region13
    $region12: #{tpu_custom_call.1} parent=1 // pred_region
      _
    $region13: #{tpu_custom_call.1} parent=1 // pred_fallthru
      _
    // Predicated region
    $region14: #{tpu_custom_call.1} parent=1 // pred_check
      _
    $region15: #{tpu_custom_call.1} parent=1 // pred_check_branch
      %40 = sbr.rel (0) target = $region17
    $region16: #{tpu_custom_call.1} parent=1 // pred_region
      %42 = dma.done [#allocation3], 128
    $region17: #{tpu_custom_call.1} parent=1 // pred_fallthru
      _
    // Predicated region
    $region18: #{tpu_custom_call.1} parent=1 // pred_check
      _
    $region19: #{tpu_custom_call.1} parent=1 // pred_check_branch
      %44 = sbr.rel (0) target = $region21
    $region20: #{tpu_custom_call.1} parent=1 // pred_region
      %46 = dma.done [#allocation6], 256
    $region21: #{tpu_custom_call.1} parent=1 // pred_fallthru
      _
    %v48 = vld [vmem:[#allocation2] sm:$0xf]
    %v49 = vld [vmem:[#allocation2 + $0x4] sm:$0xf]
    %v50 = vld [vmem:[#allocation5] sm:$0xf]
    %v51 = vld [vmem:[#allocation5 + $0x4] sm:$0xf]
    %v52 = vld [vmem:[#allocation5 + $0x8] sm:$0xf]
    %v53 = vld [vmem:[#allocation5 + $0xc] sm:$0xf]
    %v54 = vld [vmem:[%s2] sm:$0x1]
    %v56 = vperm.slane %v54, 0
    %v60 = vunpack.c.l.b16 %v48
    %v61 = vunpack.c.l.b16 %v49
    %v62 = vpack.c.b16 %v61, %v60
    %v67 = vunpack.c.l.b16 %v50
    %v68 = vunpack.c.l.b16 %v51
    %v69 = vunpack.c.l.b16 %v52
    %v70 = vunpack.c.l.b16 %v53
    %v71 = vpack.c.b16 %v68, %v67
    %v72 = vpack.c.b16 %v70, %v69
    %vm75 = vcmask 261120
    %v77 = vsel %vm75, %v62, 0
    %79 = vmatpush.bf16.msra.mxu0 0
    %80 = vmatpush.bf16.msra.mxu0 0
    %81 = vmatpush.bf16.msra.mxu0 0
    %82 = vmatpush.bf16.msra.mxu0 0
    %83 = vmatpush.bf16.msra.mxu0 0
    %84 = vmatpush.bf16.msra.mxu0 0
    %85 = vmatpush.bf16.msra.mxu0 %v72
    %86 = vmatpush.bf16.msra.mxu0 %v71
    %87 = vmatmul.bf16.gmra.mxu0 %v77
    %v88 = vpop.f32.mrf.mxu0
    %v89 = vadd.f32 %v56, %v88
    %v90 = vpop.f32.mrf.mxu0
    %v91 = vadd.f32 %v56, %v90
    %92 = vdwg.mxu0
    %v93 = vand.u32 2147483647, %v89
    %vm94 = vcmp.le.f32.partialorder %v93, 0.7853982
    %vm95 = vcmp.lt.s32.totalorder %v89, 0
    %v96 = vand.u32 %v89, 2139095040
    %v97 = vshrl.u32 %v96, 23
    %v98 = vsub.s32 %v97, 127
    %v99 = vand.u32 2147483647, %v89
    %v100 = vand.u32 %v99, 8388607
    %v101 = vor.u32 %v100, 8388608
    %v102 = vsub.s32 0, %v101
    %v103 = vadd.s32 %v98, 1
    %vm104 = vcmp.gt.s32.totalorder %v103, 0
    %v105 = vsel %vm104, %v103, 0
    %v106 = vshrl.u32 %v105, 5
    %v107 = vand.u32 %v105, 31
    %v108 = vsub.s32 32, %v107
    %v109 = vshrl.u32 683565275, %v108
    %v110 = vshll.u32 683565275, %v107
    %v111 = vshrl.u32 2475754826, %v108
    %v112 = vor.u32 %v110, %v111
    %v113 = vshll.u32 2475754826, %v107
    %v114 = vshrl.u32 2131351028, %v108
    %v115 = vor.u32 %v113, %v114
    %v116 = vshll.u32 2131351028, %v107
    %v117 = vshrl.u32 2102212464, %v108
    %v118 = vor.u32 %v116, %v117
    %v119 = vshll.u32 2102212464, %v107
    %v120 = vshrl.u32 920167782, %v108
    %v121 = vor.u32 %v119, %v120
    %v122 = vshll.u32 920167782, %v107
    %v123 = vshrl.u32 1326507024, %v108
    %v124 = vor.u32 %v122, %v123
    %vm125 = vcmp.lt.s32.totalorder %v106, 1
    %vm126 = vcmp.lt.s32.totalorder %v106, 2
    %vm127 = vcmp.lt.s32.totalorder %v106, 3
    %vm128 = vcmp.lt.s32.totalorder %v106, 4
    %v129 = vsel %vm125, %v109, %v112
    %v130 = vsel %vm128, %v118, 2102212464
    %v131 = vsel %vm127, %v115, %v130
    %v132 = vsel %vm126, %v129, %v131
    %v133 = vsel %vm125, %v112, %v115
    %v134 = vsel %vm128, %v121, 920167782
    %v135 = vsel %vm127, %v118, %v134
    %v136 = vsel %vm126, %v133, %v135
    %v137 = vsel %vm125, %v115, %v118
    %v138 = vsel %vm128, %v124, 1326507024
    %v139 = vsel %vm127, %v121, %v138
    %v140 = vsel %vm126, %v137, %v139
    %v141 = vshll.u32 %v101, 8
    %v142 = vand.u32 %v141, 65535
    %v143 = vshrl.u32 %v141, 16
    %v144 = vand.u32 %v140, 65535
    %v145 = vshrl.u32 %v140, 16
    %v146 = vmul.u32 %v142, %v144
    %v147 = vmul.u32 %v142, %v145
    %v148 = vmul.u32 %v143, %v144
    %v149 = vmul.u32 %v143, %v145
    %v150 = vshll.u32 %v147, 16
    %v151 = vshrl.u32 %v147, 16
    %v152 = vshll.u32 %v148, 16
    %v153 = vshrl.u32 %v148, 16
    %vm154 = vc.u32 %v146, %v150
    %v155 = vsel %vm154, 1, 0
    %v156 = vadd.s32 %v146, %v150
    %v157 = vadd.s32 %v149, %v155
    %vm158 = vc.u32 %v156, %v152
    %v159 = vsel %vm158, 1, 0
    %v160 = vadd.s32 %v156, %v152
    %v161 = vadd.s32 %v157, %v159
    %v162 = vadd.s32 %v161, %v151
    %v163 = vadd.s32 %v162, %v153
    %v164 = vand.u32 %v141, 65535
    %v165 = vshrl.u32 %v141, 16
    %v166 = vand.u32 %v136, 65535
    %v167 = vshrl.u32 %v136, 16
    %v168 = vmul.u32 %v164, %v166
    %v169 = vmul.u32 %v164, %v167
    %v170 = vmul.u32 %v165, %v166
    %v171 = vmul.u32 %v165, %v167
    %v172 = vshll.u32 %v169, 16
    %v173 = vshrl.u32 %v169, 16
    %v174 = vshll.u32 %v170, 16
    %v175 = vshrl.u32 %v170, 16
    %vm176 = vc.u32 %v168, %v172
    %v177 = vsel %vm176, 1, 0
    %v178 = vadd.s32 %v168, %v172
    %v179 = vadd.s32 %v171, %v177
    %vm180 = vc.u32 %v178, %v174
    %v181 = vsel %vm180, 1, 0
    %v182 = vadd.s32 %v178, %v174
    %v183 = vadd.s32 %v179, %v181
    %v184 = vadd.s32 %v183, %v173
    %v185 = vadd.s32 %v184, %v175
    %v186 = vmul.u32 %v141, %v132
    %v187 = vadd.s32 %v163, %v182
    %vm188 = vc.u32 %v163, %v182
    %v189 = vadd.s32 %v185, 1
    %v190 = vsel %vm188, %v189, %v185
    %v191 = vadd.s32 %v186, %v190
    %v192 = vadd.s32 %v191, 536870912
    %v193 = vshrl.u32 %v192, 30
    %v194 = vshll.u32 %v193, 30
    %v195 = vsub.s32 %v191, %v194
    %vm196 = vcmp.lt.s32.totalorder %v195, 0
    %v197 = vsub.s32 0, %v195
    %v198 = vsel %vm196, %v197, %v195
    %v199 = vclz %v198
    %v200 = vsub.s32 %v199, 2
    %vm201 = vcmp.gt.s32.totalorder 0, %v200
    %v202 = vsel %vm201, 0, %v200
    %v203 = vsub.s32 32, %v202
    %v204 = vshll.u32 %v195, %v202
    %v205 = vshrl.u32 %v187, %v203
    %v206 = vor.u32 %v204, %v205
    %v207 = vsub.s32 4294967266, %v202
    %v208 = vadd.s32 %v207, 127
    %v209 = vshll.u32 %v208, 23
    %v210 = vor.u32 4788187, %v209
    %v211 = vand.u32 2147483647, %v210
    %v213 = vcvt.s32.f32 %v206
    %v214 = vmul.f32 %v213, %v211
    %v215 = vxor.u32 %v214, 2147483648
    %v216 = vsel %vm95, %v215, %v214
    %v217 = vsub.s32 4, %v193
    %v218 = vsel %vm95, %v217, %v193
    %v219 = vsel %vm94, %v89, %v216
    %v220 = vsel %vm94, 0, %v218
    %v221 = vmul.f32 %v219, %v219
    %v222 = vmul.f32 %v221, -0.001358992
    %v223 = vadd.f32 %v222, 0.041655596
    %v224 = vmul.f32 %v221, %v223
    %v225 = vadd.f32 %v224, -0.4999988
    %v226 = vmul.f32 %v221, %v225
    %v227 = vadd.f32 1.0, %v226
    %v228 = vmul.f32 %v219, %v219
    %v229 = vmul.f32 %v228, -0.00019511016
    %v230 = vadd.f32 %v229, 0.008332121
    %v231 = vmul.f32 %v228, %v230
    %v232 = vadd.f32 %v231, -0.16666654
    %v233 = vmul.f32 %v228, %v232
    %v234 = vadd.f32 %v233, 1.0
    %v235 = vmul.f32 %v234, %v219
    %vm236 = vweird.f32 %v89
    %v237 = vand.u32 %v220, 3
    %vm238 = vcmp.lt.s32.totalorder %v237, 2
    %vm239 = vcmp.eq.s32.totalorder %v237, 0
    %v240 = vxor.u32 %v235, 2147483648
    %v241 = vsel %vm239, %v227, %v240
    %vm242 = vcmp.eq.s32.totalorder %v237, 2
    %v243 = vxor.u32 %v227, 2147483648
    %v244 = vsel %vm242, %v243, %v235
    %v245 = vsel %vm238, %v241, %v244
    %v246 = vsel %vm236, nan, %v245
    %v247 = vand.u32 2147483647, %v91
    %vm248 = vcmp.le.f32.partialorder %v247, 0.7853982
    %vm249 = vcmp.lt.s32.totalorder %v91, 0
    %v250 = vand.u32 %v91, 2139095040
    %v251 = vshrl.u32 %v250, 23
    %v252 = vsub.s32 %v251, 127
    %v253 = vand.u32 2147483647, %v91
    %v254 = vand.u32 %v253, 8388607
    %v255 = vor.u32 %v254, 8388608
    %v256 = vsub.s32 0, %v255
    %v257 = vadd.s32 %v252, 1
    %vm258 = vcmp.gt.s32.totalorder %v257, 0
    %v259 = vsel %vm258, %v257, 0
    %v260 = vshrl.u32 %v259, 5
    %v261 = vand.u32 %v259, 31
    %v262 = vsub.s32 32, %v261
    %v263 = vshrl.u32 683565275, %v262
    %v264 = vshll.u32 683565275, %v261
    %v265 = vshrl.u32 2475754826, %v262
    %v266 = vor.u32 %v264, %v265
    %v267 = vshll.u32 2475754826, %v261
    %v268 = vshrl.u32 2131351028, %v262
    %v269 = vor.u32 %v267, %v268
    %v270 = vshll.u32 2131351028, %v261
    %v271 = vshrl.u32 2102212464, %v262
    %v272 = vor.u32 %v270, %v271
    %v273 = vshll.u32 2102212464, %v261
    %v274 = vshrl.u32 920167782, %v262
    %v275 = vor.u32 %v273, %v274
    %v276 = vshll.u32 920167782, %v261
    %v277 = vshrl.u32 1326507024, %v262
    %v278 = vor.u32 %v276, %v277
    %vm279 = vcmp.lt.s32.totalorder %v260, 1
    %vm280 = vcmp.lt.s32.totalorder %v260, 2
    %vm281 = vcmp.lt.s32.totalorder %v260, 3
    %vm282 = vcmp.lt.s32.totalorder %v260, 4
    %v283 = vsel %vm279, %v263, %v266
    %v284 = vsel %vm282, %v272, 2102212464
    %v285 = vsel %vm281, %v269, %v284
    %v286 = vsel %vm280, %v283, %v285
    %v287 = vsel %vm279, %v266, %v269
    %v288 = vsel %vm282, %v275, 920167782
    %v289 = vsel %vm281, %v272, %v288
    %v290 = vsel %vm280, %v287, %v289
    %v291 = vsel %vm279, %v269, %v272
    %v292 = vsel %vm282, %v278, 1326507024
    %v293 = vsel %vm281, %v275, %v292
    %v294 = vsel %vm280, %v291, %v293
    %v295 = vshll.u32 %v255, 8
    %v296 = vand.u32 %v295, 65535
    %v297 = vshrl.u32 %v295, 16
    %v298 = vand.u32 %v294, 65535
    %v299 = vshrl.u32 %v294, 16
    %v300 = vmul.u32 %v296, %v298
    %v301 = vmul.u32 %v296, %v299
    %v302 = vmul.u32 %v297, %v298
    %v303 = vmul.u32 %v297, %v299
    %v304 = vshll.u32 %v301, 16
    %v305 = vshrl.u32 %v301, 16
    %v306 = vshll.u32 %v302, 16
    %v307 = vshrl.u32 %v302, 16
    %vm308 = vc.u32 %v300, %v304
    %v309 = vsel %vm308, 1, 0
    %v310 = vadd.s32 %v300, %v304
    %v311 = vadd.s32 %v303, %v309
    %vm312 = vc.u32 %v310, %v306
    %v313 = vsel %vm312, 1, 0
    %v314 = vadd.s32 %v310, %v306
    %v315 = vadd.s32 %v311, %v313
    %v316 = vadd.s32 %v315, %v305
    %v317 = vadd.s32 %v316, %v307
    %v318 = vand.u32 %v295, 65535
    %v319 = vshrl.u32 %v295, 16
    %v320 = vand.u32 %v290, 65535
    %v321 = vshrl.u32 %v290, 16
    %v322 = vmul.u32 %v318, %v320
    %v323 = vmul.u32 %v318, %v321
    %v324 = vmul.u32 %v319, %v320
    %v325 = vmul.u32 %v319, %v321
    %v326 = vshll.u32 %v323, 16
    %v327 = vshrl.u32 %v323, 16
    %v328 = vshll.u32 %v324, 16
    %v329 = vshrl.u32 %v324, 16
    %vm330 = vc.u32 %v322, %v326
    %v331 = vsel %vm330, 1, 0
    %v332 = vadd.s32 %v322, %v326
    %v333 = vadd.s32 %v325, %v331
    %vm334 = vc.u32 %v332, %v328
    %v335 = vsel %vm334, 1, 0
    %v336 = vadd.s32 %v332, %v328
    %v337 = vadd.s32 %v333, %v335
    %v338 = vadd.s32 %v337, %v327
    %v339 = vadd.s32 %v338, %v329
    %v340 = vmul.u32 %v295, %v286
    %v341 = vadd.s32 %v317, %v336
    %vm342 = vc.u32 %v317, %v336
    %v343 = vadd.s32 %v339, 1
    %v344 = vsel %vm342, %v343, %v339
    %v345 = vadd.s32 %v340, %v344
    %v346 = vadd.s32 %v345, 536870912
    %v347 = vshrl.u32 %v346, 30
    %v348 = vshll.u32 %v347, 30
    %v349 = vsub.s32 %v345, %v348
    %vm350 = vcmp.lt.s32.totalorder %v349, 0
    %v351 = vsub.s32 0, %v349
    %v352 = vsel %vm350, %v351, %v349
    %v353 = vclz %v352
    %v354 = vsub.s32 %v353, 2
    %vm355 = vcmp.gt.s32.totalorder 0, %v354
    %v356 = vsel %vm355, 0, %v354
    %v357 = vsub.s32 32, %v356
    %v358 = vshll.u32 %v349, %v356
    %v359 = vshrl.u32 %v341, %v357
    %v360 = vor.u32 %v358, %v359
    %v361 = vsub.s32 4294967266, %v356
    %v362 = vadd.s32 %v361, 127
    %v363 = vshll.u32 %v362, 23
    %v364 = vor.u32 4788187, %v363
    %v365 = vand.u32 2147483647, %v364
    %v367 = vcvt.s32.f32 %v360
    %v368 = vmul.f32 %v367, %v365
    %v369 = vxor.u32 %v368, 2147483648
    %v370 = vsel %vm249, %v369, %v368
    %v371 = vsub.s32 4, %v347
    %v372 = vsel %vm249, %v371, %v347
    %v373 = vsel %vm248, %v91, %v370
    %v374 = vsel %vm248, 0, %v372
    %v375 = vmul.f32 %v373, %v373
    %v376 = vmul.f32 %v375, -0.001358992
    %v377 = vadd.f32 %v376, 0.041655596
    %v378 = vmul.f32 %v375, %v377
    %v379 = vadd.f32 %v378, -0.4999988
    %v380 = vmul.f32 %v375, %v379
    %v381 = vadd.f32 1.0, %v380
    %v382 = vmul.f32 %v373, %v373
    %v383 = vmul.f32 %v382, -0.00019511016
    %v384 = vadd.f32 %v383, 0.008332121
    %v385 = vmul.f32 %v382, %v384
    %v386 = vadd.f32 %v385, -0.16666654
    %v387 = vmul.f32 %v382, %v386
    %v388 = vadd.f32 %v387, 1.0
    %v389 = vmul.f32 %v388, %v373
    %vm390 = vweird.f32 %v91
    %v391 = vand.u32 %v374, 3
    %vm392 = vcmp.lt.s32.totalorder %v391, 2
    %vm393 = vcmp.eq.s32.totalorder %v391, 0
    %v394 = vxor.u32 %v389, 2147483648
    %v395 = vsel %vm393, %v381, %v394
    %vm396 = vcmp.eq.s32.totalorder %v391, 2
    %v397 = vxor.u32 %v381, 2147483648
    %v398 = vsel %vm396, %v397, %v389
    %v399 = vsel %vm392, %v395, %v398
    %v400 = vsel %vm390, nan, %v399
    %401 = vst [vmem:[#allocation7] sm:$0xff] %v246
    %402 = vst [vmem:[#allocation7 + $0x8] sm:$0xff] %v400
    // Predicated region
    $region22: #{tpu_custom_call.1} parent=1 // pred_check
      _
    $region23: #{tpu_custom_call.1} parent=1 // pred_check_branch
      %404 = sbr.rel (0) target = $region25
    $region24: #{tpu_custom_call.1} parent=1 // pred_region
      %406 = vsyncadd [#allocation4], 0
      %s407 = sshll.u32 [#allocation7], 4
      %s408 = int_to_ptr.vmem [resolvable:$true] %s407
      %s409 = sshll.u32 %s3, 4
      %s410 = int_to_ptr.hbm [resolvable:$true] %s409
      %415 = dma.vmem_to_hbm [thread:$0]  %s408, 256, %s410, [#allocation4], 128, 128, 8
    $region25: #{tpu_custom_call.1} parent=1 // pred_fallthru
      _
    // Predicated region
    $region26: #{tpu_custom_call.1} parent=1 // pred_check
      _
    $region27: #{tpu_custom_call.1} parent=1 // pred_check_branch
      %417 = sbr.rel (0) target = $region29
    $region28: #{tpu_custom_call.1} parent=1 // pred_region
      %419 = dma.done [#allocation4], 256
    $region29: #{tpu_custom_call.1} parent=1 // pred_fallthru
      _
    %420 = vsyncpa [#allocation3], 1
    %421 = vsyncpa [#allocation6], 1
    %422 = vsyncpa [#allocation4], 1

</llo_original>
